<compile_context>
chip_gen: v7x
topology: tpu7x:2x2x1
jax: 0.10.0
libtpu: 0.0.40
codegen_flags: <defaults>
</compile_context>

<pallas_src>
import functools

import jax
import jax.numpy as jnp
from jax import lax
from jax.experimental import pallas as pl
from jax.experimental.pallas import tpu as pltpu


# Scoped VMEM cap: safe on v7x (64 MiB physical); raises the 16/32 MiB scoped
# defaults on v5e/v6e.  bf16 tiles at the defaults below stay well under this.
_VMEM_LIMIT = 48 * 1024 * 1024
# Resident budget (double-buffered x/out tiles + resident weights) under which
# the weight-stationary projection path is used.
_WS_BUDGET_BYTES = 28 * 1024 * 1024


def _round_up(x, m):
    return ((x + m - 1) // m) * m


def _choose_tile(dim, preferred, granule):
    """Largest hardware-aligned tile <= preferred that evenly divides dim.

    Falls back to the full extent, which is always a legal Pallas block shape."""
    if dim <= preferred:
        return dim
    t = (preferred // granule) * granule
    while t >= granule:
        if dim % t == 0:
            return t
        t -= granule
    return dim


# ----------------------------------------------------------------------------
# Projection kernels (Linear layers)
# ----------------------------------------------------------------------------
def _make_ws_proj_kernel(n_weights, has_bias):
    """Weight-stationary fused projection: the x tile is loaded once and pushed
    through all resident weights; each dot accumulates in f32 on the MXU."""

    def kernel(*refs):
        x_ref = refs[0]
        w_refs = refs[1:1 + n_weights]
        idx = 1 + n_weights
        b_ref = refs[idx] if has_bias else None
        o_refs = refs[idx + (1 if has_bias else 0):]

        x = x_ref[...]
        for w_ref, o_ref in zip(w_refs, o_refs):
            y = jnp.dot(x, w_ref[...], preferred_element_type=jnp.float32)
            if b_ref is not None:
                y = y + b_ref[...].astype(jnp.float32)
            o_ref[...] = y.astype(o_ref.dtype)

    return kernel


def _make_ktiled_matmul_kernel(has_bias):
    """K-tiled fallback (weights too large to keep resident)."""

    def kernel(*refs):
        if has_bias:
            x_ref, w_ref, b_ref, o_ref, acc_ref = refs
        else:
            x_ref, w_ref, o_ref, acc_ref = refs

        @pl.when(pl.program_id(2) == 0)
        def _():
            acc_ref[...] = jnp.zeros_like(acc_ref)

        acc_ref[...] += jnp.dot(x_ref[...], w_ref[...],
                                preferred_element_type=jnp.float32)

        @pl.when(pl.program_id(2) == pl.num_programs(2) - 1)
        def _():
            y = acc_ref[...]
            if has_bias:
                y = y + b_ref[...].astype(jnp.float32)
            o_ref[...] = y.astype(o_ref.dtype)

    return kernel


def _pallas_linear_ktiled(x, w, bias=None, *, tm=512, tn=512, tk=512):
    R, Din = x.shape
    Dout = w.shape[1]
    tm = _choose_tile(R, tm, 8)
    tn = _choose_tile(Dout, tn, 128)
    tk = _choose_tile(Din, tk, 128)
    grid = (R // tm, Dout // tn, Din // tk)
    has_bias = bias is not None

    in_specs = [pl.BlockSpec((tm, tk), lambda i, j, k: (i, k)),
                pl.BlockSpec((tk, tn), lambda i, j, k: (k, j))]
    args = [x, w]
    if has_bias:
        in_specs.append(pl.BlockSpec((1, tn), lambda i, j, k: (0, j)))
        args.append(bias.reshape(1, Dout).astype(jnp.float32))

    return pl.pallas_call(
        _make_ktiled_matmul_kernel(has_bias),
        out_shape=jax.ShapeDtypeStruct((R, Dout), x.dtype),
        grid=grid,
        in_specs=in_specs,
        out_specs=pl.BlockSpec((tm, tn), lambda i, j, k: (i, j)),
        scratch_shapes=[pltpu.VMEM((tm, tn), jnp.float32)],
        compiler_params=pltpu.CompilerParams(
            dimension_semantics=("parallel", "parallel", "arbitrary"),
            vmem_limit_bytes=_VMEM_LIMIT,
        ),
    )(*args)


def pallas_linear_fused(x, weights, bias=None, *, tm=512):
    """y_i = x @ w_i (+ bias for the single-weight case), fused over weights.

    Weight-stationary when the resident working set fits the VMEM budget:
    grid = (R // tm,), each weight DMA'd once; otherwise falls back to the
    K-tiled accumulator kernel per weight."""
    R, Din = x.shape
    weights = tuple(weights)
    assert bias is None or len(weights) == 1
    douts = [int(w.shape[1]) for w in weights]
    tm_eff = _choose_tile(R, tm, 8)

    itemsize = jnp.dtype(x.dtype).itemsize
    resident_bytes = itemsize * (2 * tm_eff * Din            # x tile (dbl-buffered)
                                 + 2 * tm_eff * sum(douts)   # out tiles
                                 + 2 * Din * sum(douts))     # weights
    if resident_bytes > _WS_BUDGET_BYTES:
        outs = tuple(
            _pallas_linear_ktiled(x, w, bias if len(weights) == 1 else None)
            for w in weights)
        return outs if len(outs) > 1 else outs[0]

    grid = (R // tm_eff,)
    in_specs = [pl.BlockSpec((tm_eff, Din), lambda i: (i, 0))]
    args = [x]
    for w in weights:
        in_specs.append(pl.BlockSpec(tuple(w.shape), lambda i: (0, 0)))
        args.append(w)
    has_bias = bias is not None
    if has_bias:
        in_specs.append(pl.BlockSpec((1, douts[0]), lambda i: (0, 0)))
        args.append(bias.reshape(1, douts[0]).astype(jnp.float32))

    out_specs = tuple(pl.BlockSpec((tm_eff, d), lambda i: (i, 0)) for d in douts)
    out_shape = tuple(jax.ShapeDtypeStruct((R, d), x.dtype) for d in douts)

    outs = pl.pallas_call(
        _make_ws_proj_kernel(len(weights), has_bias),
        out_shape=out_shape,
        grid=grid,
        in_specs=in_specs,
        out_specs=out_specs,
        compiler_params=pltpu.CompilerParams(
            dimension_semantics=("parallel",),
            vmem_limit_bytes=_VMEM_LIMIT,
        ),
    )(*args)
    return outs if len(outs) > 1 else outs[0]


# ----------------------------------------------------------------------------
# Flash-style multi-head attention kernel
# ----------------------------------------------------------------------------
def _flash_attention_kernel(q_ref, k_ref, v_ref, o_ref,
                            m_ref, l_ref, acc_ref,
                            *, heads, dim_head, kv_len, needs_mask):
    # Blocks (batch dim squeezed):
    #   q_ref, o_ref : (tq,  heads*dim_head)    k_ref, v_ref : (tkv, heads*dim_head)
    # Scratch (persists across the kv grid axis):
    #   m_ref, l_ref : (heads, tq, 1) f32       acc_ref : (heads, tq, dim_head) f32
    kv_idx = pl.program_id(2)
    tkv = k_ref.shape[0]
    # exp / p run in the IO dtype (bf16 on the production path => bf16 EUP/VPU
    # on v6e/v7x and a bf16 MXU operand for p@V); running stats stay f32.
    work_dtype = q_ref.dtype

    @pl.when(kv_idx == 0)
    def _():
        m_ref[...] = jnp.full_like(m_ref, -jnp.inf)
        l_ref[...] = jnp.zeros_like(l_ref)
        acc_ref[...] = jnp.zeros_like(acc_ref)

    if needs_mask:
        # Additive mask for padded KV positions (only present when M was padded
        # up to a tkv multiple in the wrapper).  Computed once per kv step.
        kv_pos = kv_idx * tkv + lax.broadcasted_iota(jnp.int32, (1, tkv), 1)
        neg = jnp.where(kv_pos < kv_len, 0.0, -1e30).astype(jnp.float32)
    else:
        neg = None

    # Static (unrolled) loop over heads: heads are lane slices of the fused
    # (seq, heads*dim_head) layout — no head split/merge transposes anywhere.
    # The softmax scale is already folded into the Q projection weights.
    for h in range(heads):
        s = h * dim_head
        qh = q_ref[:, s:s + dim_head]                       # (tq,  d)
        kh = k_ref[:, s:s + dim_head]                       # (tkv, d)
        vh = v_ref[:, s:s + dim_head]                       # (tkv, d)

        # sim = q @ k^T — contract on d without an explicit transpose; operands
        # keep their input dtype (bf16 stays bf16 on the MXU), accumulation f32.
        sim = lax.dot_general(
            qh, kh, dimension_numbers=(((1,), (1,)), ((), ())),
            preferred_element_type=jnp.float32)             # (tq, tkv) f32
        if neg is not None:
            sim = sim + neg

        m_prev = m_ref[h]                                   # (tq, 1) f32
        m_new = jnp.maximum(m_prev, jnp.max(sim, axis=-1, keepdims=True))
        alpha = jnp.exp(m_prev - m_new)                     # f32
        p = jnp.exp((sim - m_new).astype(work_dtype))       # (tq, tkv)

        l_ref[h] = alpha * l_ref[h] + jnp.sum(
            p.astype(jnp.float32), axis=-1, keepdims=True)
        acc_ref[h] = alpha * acc_ref[h] + jnp.dot(
            p, vh, preferred_element_type=jnp.float32)
        m_ref[h] = m_new

    @pl.when(kv_idx == pl.num_programs(2) - 1)
    def _():
        # Normalize each head (EUP approx reciprocal — otherwise-idle slot) and
        # store it straight into its lane slice of the output block.  No
        # concatenate temporary; the HBM writeback of the whole block is still
        # one lane-dense store handled by the pipeline.
        for h in range(heads):
            s = h * dim_head
            inv_l = pl.reciprocal(l_ref[h], approx=True)
            o_ref[:, s:s + dim_head] = (acc_ref[h] * inv_l).astype(o_ref.dtype)


def pallas_flash_attention(q, k, v, *, heads, dim_head, tq=128, tkv=128):
    # q: (B, N, heads*dim_head), k/v: (B, M, heads*dim_head)
    B, N, HD = q.shape
    M = k.shape[1]

    # Keep MXU / lane shapes sane: pad KV length to a multiple of 128 (masked
    # in-kernel) and the query length to a multiple of the q tile.
    tq = min(tq, _round_up(N, 8))
    tkv = min(tkv, _round_up(M, 128))
    n_pad = _round_up(N, tq)
    m_pad = _round_up(M, tkv)
    if n_pad != N:
        q = jnp.pad(q, ((0, 0), (0, n_pad - N), (0, 0)))
    if m_pad != M:
        k = jnp.pad(k, ((0, 0), (0, m_pad - M), (0, 0)))
        v = jnp.pad(v, ((0, 0), (0, m_pad - M), (0, 0)))

    grid = (B, n_pad // tq, m_pad // tkv)
    kern = functools.partial(
        _flash_attention_kernel, heads=heads, dim_head=dim_head,
        kv_len=M, needs_mask=(m_pad != M))

    out = pl.pallas_call(
        kern,
        out_shape=jax.ShapeDtypeStruct((B, n_pad, HD), q.dtype),
        grid=grid,
        in_specs=[
            pl.BlockSpec((None, tq, HD), lambda b, qi, kj: (b, qi, 0)),
            pl.BlockSpec((None, tkv, HD), lambda b, qi, kj: (b, kj, 0)),
            pl.BlockSpec((None, tkv, HD), lambda b, qi, kj: (b, kj, 0)),
        ],
        out_specs=pl.BlockSpec((None, tq, HD), lambda b, qi, kj: (b, qi, 0)),
        scratch_shapes=[
            pltpu.VMEM((heads, tq, 1), jnp.float32),          # running max
            pltpu.VMEM((heads, tq, 1), jnp.float32),          # running sum
            pltpu.VMEM((heads, tq, dim_head), jnp.float32),   # running acc
        ],
        compiler_params=pltpu.CompilerParams(
            dimension_semantics=("parallel", "parallel", "arbitrary"),
            vmem_limit_bytes=_VMEM_LIMIT,
        ),
    )(q, k, v)

    if n_pad != N:
        out = out[:, :N, :]
    return out


# ----------------------------------------------------------------------------
# CrossAttention forward (glue in plain JAX, hot paths in Pallas)
# ----------------------------------------------------------------------------
def init_cross_attention_params(key, query_dim, context_dim=None, heads=8, dim_head=64):
    context_dim = context_dim if context_dim is not None else query_dim
    inner_dim = dim_head * heads
    k1, k2, k3, k4, k5 = jax.random.split(key, 5)

    def uinit(k, fan_in, shape):
        bound = 1.0 / jnp.sqrt(fan_in)
        return jax.random.uniform(k, shape, jnp.float32, -bound, bound)

    return {
        "w_q": uinit(k1, query_dim, (query_dim, inner_dim)),
        "w_k": uinit(k2, context_dim, (context_dim, inner_dim)),
        "w_v": uinit(k3, context_dim, (context_dim, inner_dim)),
        "w_o": uinit(k4, inner_dim, (inner_dim, query_dim)),
        "b_o": uinit(k5, inner_dim, (query_dim,)),
    }


def cross_attention_forward(params, x, context=None, heads=8, dim_head=64,
                            compute_dtype=jnp.bfloat16):
    # x: (B, N, query_dim); context: (B, M, context_dim) or None (self-attention)
    self_attn = context is None
    if self_attn:
        context = x
    B, N, Dq = x.shape
    M, Dc = context.shape[1], context.shape[2]
    inner_dim = heads * dim_head
    scale = float(dim_head) ** (-0.5)
    cd = compute_dtype

    # bf16 MXU operands (f32 accumulation inside the kernels).  The softmax
    # scale is folded into w_q once here, so the attention kernel never scales
    # the (tq, tkv) similarity tiles.
    w_q = (params["w_q"] * scale).astype(cd)
    w_k = params["w_k"].astype(cd)
    w_v = params["w_v"].astype(cd)
    w_o = params["w_o"].astype(cd)
    b_o = params["b_o"].astype(jnp.float32)

    xr = x.reshape(B * N, Dq).astype(cd)
    if self_attn:
        # One HBM read of the activations feeds all three projections.
        q, k, v = pallas_linear_fused(xr, (w_q, w_k, w_v))
    else:
        cr = context.reshape(B * M, Dc).astype(cd)
        q = pallas_linear_fused(xr, (w_q,))
        k, v = pallas_linear_fused(cr, (w_k, w_v))
    q = q.reshape(B, N, inner_dim)
    k = k.reshape(B, M, inner_dim)
    v = v.reshape(B, M, inner_dim)

    # Flash attention over the fused head layout (no split/merge transposes).
    out = pallas_flash_attention(q, k, v, heads=heads, dim_head=dim_head)

    # Output projection (weight-stationary matmul + bias).
    out = pallas_linear_fused(out.reshape(B * N, inner_dim), (w_o,), bias=b_o)
    out = out.reshape(B, N, Dq).astype(x.dtype)
    # Dropout(p=0.0) / eval mode is identity.
    # TODO(synk): training-mode dropout not implemented.
    return out


# ----------------------------------------------------------------------------
# Pure-JAX reference for correctness check
# ----------------------------------------------------------------------------
def reference_forward(params, x, context=None, heads=8, dim_head=64):
    if context is None:
        context = x
    B, N, _ = x.shape
    M = context.shape[1]
    scale = float(dim_head) ** (-0.5)
    q = x @ params["w_q"]
    k = context @ params["w_k"]
    v = context @ params["w_v"]

    def sh(t, S):
        return t.reshape(B, S, heads, dim_head).transpose(0, 2, 1, 3)

    qh, kh, vh = sh(q, N), sh(k, M), sh(v, M)
    sim = jnp.einsum("bhid,bhjd->bhij", qh, kh) * scale
    attn = jax.nn.softmax(sim, axis=-1)
    out = jnp.einsum("bhij,bhjd->bhid", attn, vh)
    out = out.transpose(0, 2, 1, 3).reshape(B, N, heads * dim_head)
    return out @ params["w_o"] + params["b_o"]


# ----------------------------------------------------------------------------
if __name__ == "__main__":
    # Small shapes: batch=2, query seq=8, context seq=8, query_dim=32,
    # context_dim=32, heads=4, dim_head=16 (inner_dim=64).
    B, N, M = 2, 8, 8
    query_dim, context_dim = 32, 32
    heads, dim_head = 4, 16

    key = jax.random.PRNGKey(0)
    kp, kx, kc = jax.random.split(key, 3)
    params = init_cross_attention_params(kp, query_dim, context_dim, heads, dim_head)
    x = jax.random.normal(kx, (B, N, query_dim), jnp.float32)
    context = jax.random.normal(kc, (B, M, context_dim), jnp.float32)

    ref = reference_forward(params, x, context, heads=heads, dim_head=dim_head)

    # f32 compute path — tight check of the kernel structure / online softmax.
    out_f32 = jax.block_until_ready(cross_attention_forward(
        params, x, context, heads=heads, dim_head=dim_head,
        compute_dtype=jnp.float32))
    assert out_f32.shape == (B, N, query_dim)
    assert jnp.allclose(out_f32, ref, atol=2e-3, rtol=2e-3), "f32 path mismatch"

    # bf16 MXU-operand path (production default) — tolerance covers bf16 rounding.
    out_bf16 = jax.block_until_ready(cross_attention_forward(
        params, x, context, heads=heads, dim_head=dim_head,
        compute_dtype=jnp.bfloat16))
    assert jnp.allclose(out_bf16, ref, atol=5e-2, rtol=5e-2), "bf16 path mismatch"

    # Self-attention path (context=None) exercises the fused QKV projection.
    ref_self = reference_forward(params, x, None, heads=heads, dim_head=dim_head)
    out_self = jax.block_until_ready(cross_attention_forward(
        params, x, None, heads=heads, dim_head=dim_head,
        compute_dtype=jnp.bfloat16))
    assert jnp.allclose(out_self, ref_self, atol=5e-2, rtol=5e-2), "self-attn mismatch"

    print("KERNEL_OK")
</pallas_src>

<mosaic_0001>
module attributes {stable_mosaic.version = 11 : i64} {
  func.func @kernel(%arg0: i32, %arg1: memref<16x32xf32, #tpu.memory_space<vmem>>, %arg2: memref<32x64xf32, #tpu.memory_space<vmem>>, %arg3: memref<16x64xf32, #tpu.memory_space<vmem>>) attributes {dimension_semantics = [#tpu.dimension_semantics<parallel>], iteration_bounds = array<i64: 1>, scalar_prefetch = 0 : i64, scratch_operands = 0 : i64, tpu.core_type = #tpu.core_type<tc>, window_params = [{transform_indices = @transform_0, window_bounds = array<i64: 16, 32>}, {pipeline_mode = #tpu.pipeline_mode<synchronous>, transform_indices = @transform_1, window_bounds = array<i64: 32, 64>}, {transform_indices = @transform_2, window_bounds = array<i64: 16, 64>}]} {
    %c0 = arith.constant 0 : index
    %c0_0 = arith.constant 0 : index
    %0 = vector.load %arg1[%c0, %c0_0] : memref<16x32xf32, #tpu.memory_space<vmem>>, vector<16x32xf32>
    %c0_1 = arith.constant 0 : index
    %c0_2 = arith.constant 0 : index
    %1 = vector.load %arg2[%c0_1, %c0_2] : memref<32x64xf32, #tpu.memory_space<vmem>>, vector<32x64xf32>
    %cst = arith.constant dense<0.000000e+00> : vector<16x64xf32>
    %2 = tpu.matmul %0, %1, %cst {dimension_numbers = #tpu.dot_dimension_numbers<[1], [0], [0], [1], [0, 0, 1, 1], [], []>} : vector<16x32xf32>, vector<32x64xf32>, vector<16x64xf32> -> vector<16x64xf32>
    %c0_3 = arith.constant 0 : index
    %c0_4 = arith.constant 0 : index
    %3 = vector.load %arg3[%c0_3, %c0_4] : memref<16x64xf32, #tpu.memory_space<vmem>>, vector<16x64xf32>
    tpu.vector_store %arg3[%c0_3, %c0_4], %2 {strides = array<i32>} : memref<16x64xf32, #tpu.memory_space<vmem>>, vector<16x64xf32>,
    return
  }
  func.func @transform_0(%arg0: i32) -> (i32, i32) {
    %c0_i32 = arith.constant 0 : i32
    %c0_i32_0 = arith.constant 0 : i32
    return %arg0, %c0_i32 : i32, i32
  }
  func.func @transform_1(%arg0: i32) -> (i32, i32) {
    %c0_i32 = arith.constant 0 : i32
    %c0_i32_0 = arith.constant 0 : i32
    %c0_i32_1 = arith.constant 0 : i32
    return %c0_i32, %c0_i32_0 : i32, i32
  }
  func.func @transform_2(%arg0: i32) -> (i32, i32) {
    %c0_i32 = arith.constant 0 : i32
    %c0_i32_0 = arith.constant 0 : i32
    return %arg0, %c0_i32 : i32, i32
  }
}

</mosaic_0001>

<llo_original>
// kernel: tpu_custom_call.1
$region0: #{tpu_custom_call.1}
  #allocation0 [shape = 'u32[]', space=smem, size = 0x4, offset = 0x4, fixed_abs, tag = 'smem constant byte address 0x4 - core index']
  #allocation1 [shape = 'u32[144,128]{1,0:T(1,128)}', space=vmem, size = 0x12000, scoped, tag = 'internal scratch']
  %s0 = inlined_call_operand.hbm [shape: f32[16,32], index: 0, kind: input, shape index: {}]
  %s1 = inlined_call_operand.hbm [shape: f32[32,64], index: 1, kind: input, shape index: {}]
  %s2 = inlined_call_operand.hbm [shape: f32[16,64], index: 2, kind: output, shape index: {}]
  %s3 = sld [smem:[#allocation0]]
  $region26: #{tpu_custom_call.1} parent=0
    _
  %s5 = ssub.s32 1, %s3
  %s6 = scalar_select 0, %s5, %s3
  $region1: #{tpu_custom_call.1} parent=0
    #allocation2 [shape = 'u8[8192]{0}', space=vmem, size = 0x2000, scoped, tag = 'input window, operand 0, single buffered']
    #allocation3 [shape = 's32[1]{0}', space=sflag, size = 0x4, scoped, tag = 'scoped memory for tpu_custom_call.1']
    #allocation4 [shape = 's32[1]{0}', space=sflag, size = 0x4, scoped, tag = 'scoped memory for tpu_custom_call.1']
    #allocation5 [shape = 'u8[16384]{0}', space=vmem, size = 0x4000, scoped, tag = 'input window, operand 1, single buffered']
    #allocation6 [shape = 's32[1]{0}', space=sflag, size = 0x4, scoped, tag = 'scoped memory for tpu_custom_call.1']
    #allocation7 [shape = 'u8[8192]{0}', space=vmem, size = 0x2000, scoped, tag = 'output window, operand 0, single buffered']
    %7 = vsyncpa [#allocation3], 0
    %8 = vsyncpa [#allocation6], 0
    %9 = vsyncpa [#allocation4], 0
    // Predicated region
    $region2: #{tpu_custom_call.1} parent=1 // pred_check
      _
    $region3: #{tpu_custom_call.1} parent=1 // pred_check_branch
      %11 = sbr.rel (0) target = $region5
    $region4: #{tpu_custom_call.1} parent=1 // pred_region
      %s13 = ssub.s32 256, 256
      %14 = vsyncadd [#allocation3], %s13
      %s15 = sshll.u32 [#allocation2], 4
      %s16 = int_to_ptr.vmem [resolvable:$true] %s15
      %21 = dma.hbm_to_vmem [thread:$0]  %s0, 256, %s16, [#allocation3], 128, 128, 8
    $region5: #{tpu_custom_call.1} parent=1 // pred_fallthru
      _
    // Predicated region
    $region6: #{tpu_custom_call.1} parent=1 // pred_check
      _
    $region7: #{tpu_custom_call.1} parent=1 // pred_check_branch
      %23 = sbr.rel (0) target = $region9
    $region8: #{tpu_custom_call.1} parent=1 // pred_region
      %s25 = ssub.s32 512, 512
      %26 = vsyncadd [#allocation6], %s25
      %s27 = sshll.u32 [#allocation5], 4
      %s28 = int_to_ptr.vmem [resolvable:$true] %s27
      %33 = dma.hbm_to_vmem [thread:$0]  %s1, 512, %s28, [#allocation6], 128, 128, 8
    $region9: #{tpu_custom_call.1} parent=1 // pred_fallthru
      _
    // Predicated region
    $region10: #{tpu_custom_call.1} parent=1 // pred_check
      _
    $region11: #{tpu_custom_call.1} parent=1 // pred_check_branch
      %35 = sbr.rel (0) target = $region13
    $region12: #{tpu_custom_call.1} parent=1 // pred_region
      %36 = dma.done [#allocation3], 256
    $region13: #{tpu_custom_call.1} parent=1 // pred_fallthru
      _
    // Predicated region
    $region14: #{tpu_custom_call.1} parent=1 // pred_check
      _
    $region15: #{tpu_custom_call.1} parent=1 // pred_check_branch
      %38 = sbr.rel (0) target = $region17
    $region16: #{tpu_custom_call.1} parent=1 // pred_region
      %39 = dma.done [#allocation6], 512
    $region17: #{tpu_custom_call.1} parent=1 // pred_fallthru
      _
    %v40 = vld [vmem:[#allocation2] sm:$0xff]
    %v41 = vld [vmem:[#allocation2 + $0x8] sm:$0xff]
    %v42 = vld [vmem:[#allocation5] sm:$0xff]
    %v43 = vld [vmem:[#allocation5 + $0x8] sm:$0xff]
    %v44 = vld [vmem:[#allocation5 + $0x10] sm:$0xff]
    %v45 = vld [vmem:[#allocation5 + $0x18] sm:$0xff]
    %vm46 = vcmask 261120
    %v48 = vsel %vm46, %v40, 0
    %v51 = vsel %vm46, %v41, 0
    %53 = vmatprep.subr.mxu0 0.0
    %54 = vmatpush1.msra.mxu0 %v42
    %55 = vmatprep.subr.mxu0 0.0
    %56 = vmatpush1.msra.mxu0 %v43
    %57 = vmatprep.subr.mxu0 0.0
    %58 = vmatpush1.msra.mxu0 %v44
    %59 = vmatprep.subr.mxu0 0.0
    %60 = vmatpush1.msra.mxu0 %v45
    %61 = vmatprep.subr.mxu0 0.0
    %62 = vmatpush1.msra.mxu0 0.0
    %63 = vmatprep.subr.mxu0 0.0
    %64 = vmatpush1.msra.mxu0 0.0
    %65 = vmatprep.subr.mxu0 0.0
    %66 = vmatpush1.msra.mxu0 0.0
    %67 = vmatprep.subr.mxu0 0.0
    %68 = vmatpush1.msra.mxu0 0.0
    %69 = vmatprep.subr.mxu0 0.0
    %70 = vmatpush1.msra.mxu0 0.0
    %71 = vmatprep.subr.mxu0 0.0
    %72 = vmatpush1.msra.mxu0 0.0
    %73 = vmatprep.subr.mxu0 0.0
    %74 = vmatpush1.msra.mxu0 0.0
    %75 = vmatprep.subr.mxu0 0.0
    %76 = vmatpush1.msra.mxu0 0.0
    %77 = vmatprep.subr.mxu0 0.0
    %78 = vmatpush1.msra.mxu0 0.0
    %79 = vmatprep.subr.mxu0 0.0
    %80 = vmatpush1.msra.mxu0 0.0
    %81 = vmatprep.subr.mxu0 0.0
    %82 = vmatpush1.msra.mxu0 0.0
    %83 = vmatprep.subr.mxu0 0.0
    %84 = vmatpush1.msra.mxu0 0.0
    %85 = vmatprep.subr.mxu0 0.0
    %86 = vmatpush1.msra.mxu0 0.0
    %87 = vmatprep.subr.mxu0 0.0
    %88 = vmatpush1.msra.mxu0 0.0
    %89 = vmatprep.subr.mxu0 0.0
    %90 = vmatpush1.msra.mxu0 0.0
    %91 = vmatprep.subr.mxu0 0.0
    %92 = vmatpush1.msra.mxu0 0.0
    %93 = vmatprep.subr.mxu0 0.0
    %94 = vmatpush1.msra.mxu0 0.0
    %95 = vmatprep.subr.mxu0 0.0
    %96 = vmatpush1.msra.mxu0 0.0
    %97 = vmatprep.subr.mxu0 0.0
    %98 = vmatpush1.msra.mxu0 0.0
    %99 = vmatprep.subr.mxu0 0.0
    %100 = vmatpush1.msra.mxu0 0.0
    %101 = vmatprep.subr.mxu0 0.0
    %102 = vmatpush1.msra.mxu0 0.0
    %103 = vmatprep.subr.mxu0 0.0
    %104 = vmatpush1.msra.mxu0 0.0
    %105 = vmatprep.subr.mxu0 0.0
    %106 = vmatpush1.msra.mxu0 0.0
    %107 = vmatprep.subr.mxu0 0.0
    %108 = vmatpush1.msra.mxu0 0.0
    %109 = vmatprep.subr.mxu0 0.0
    %110 = vmatpush1.msra.mxu0 0.0
    %111 = vmatprep.subr.mxu0 0.0
    %112 = vmatpush1.msra.mxu0 0.0
    %113 = vmatprep.subr.mxu0 0.0
    %114 = vmatpush1.msra.mxu0 0.0
    %115 = vmatprep.subr.mxu0 0.0
    %116 = vmatpush1.msra.mxu0 0.0
    %117 = vmatprep.mubr.f32.mxu0 0.0
    %118 = vmatmul.mubr.f32.gmra.mrb[0].mxu0 %v48
    %v119 = vpop.f32.mrb[0].mxu0
    %v120 = vadd.f32 0.0, %v119
    %v121 = vpop.f32.mrb[0].mxu0
    %122 = vmatprep.mubr.f32.mxu0 0.0
    %123 = vmatmul.mubr.f32.gmra.mrb[0].mxu0 %v51
    %v124 = vpop.f32.mrb[0].mxu0
    %v125 = vadd.f32 0.0, %v124
    %v126 = vpop.f32.mrb[0].mxu0
    %127 = vdwg.mxu0
    %vm128 = vcmask 523264
    %129 = vst.msk [vmem:[#allocation7] sm:$0xff] %vm128, %v120
    %130 = vst.msk [vmem:[#allocation7 + $0x8] sm:$0xff] %vm128, %v125
    // Predicated region
    $region18: #{tpu_custom_call.1} parent=1 // pred_check
      _
    $region19: #{tpu_custom_call.1} parent=1 // pred_check_branch
      %132 = sbr.rel (0) target = $region21
    $region20: #{tpu_custom_call.1} parent=1 // pred_region
      %s134 = ssub.s32 256, 256
      %135 = vsyncadd [#allocation4], %s134
      %s136 = sshll.u32 [#allocation7], 4
      %s137 = int_to_ptr.vmem [resolvable:$true] %s136
      %142 = dma.vmem_to_hbm [thread:$0]  %s137, 256, %s2, [#allocation4], 128, 128, 8
    $region21: #{tpu_custom_call.1} parent=1 // pred_fallthru
      _
    // Predicated region
    $region22: #{tpu_custom_call.1} parent=1 // pred_check
      _
    $region23: #{tpu_custom_call.1} parent=1 // pred_check_branch
      %144 = sbr.rel (0) target = $region25
    $region24: #{tpu_custom_call.1} parent=1 // pred_region
      %145 = dma.done [#allocation4], 256
    $region25: #{tpu_custom_call.1} parent=1 // pred_fallthru
      _
    %146 = vsyncpa [#allocation3], 1
    %147 = vsyncpa [#allocation6], 1
    %148 = vsyncpa [#allocation4], 1

</llo_original>
